<compile_context>
chip_gen: v5e
topology: v5e:2x2
jax: 0.10.0
libtpu: 0.0.40
codegen_flags: <defaults>
</compile_context>

<pallas_src>
import jax
import jax.numpy as jnp
from jax.experimental import pallas as pl
from jax.experimental.pallas import tpu as pltpu

# --- Problem constants (from the PyTorch module) ------------------------------
N = 3              # nodes per graph (data.x = torch.randn(3, 16))
F_IN = 16          # data.num_features
HEADS = 2
F_OUT = 8
NEG_SLOPE = 0.2    # GATConv default negative_slope

# --- Batching / tiling constants ----------------------------------------------
N_PAD = 8                      # nodes per graph padded to a sublane multiple
GRAPHS_PER_BLOCK = 16          # 16 graphs * 8 padded nodes = 128-row tile
NODE_BLOCK = GRAPHS_PER_BLOCK * N_PAD       # 128
NUM_BLOCKS = 2                 # even -> both TCs busy on v7x megacore
NUM_GRAPHS = NUM_BLOCKS * GRAPHS_PER_BLOCK  # 32 independent graphs

P_COLS = HEADS * F_OUT + 2 * HEADS          # 20: [xp | a_src(2) | a_dst(2)]
P_ROWS = F_IN + 1                           # 17: [W_aug ; bias row]

MASK_OFF = -1e30   # additive mask value (finite: avoids inf-inf -> NaN)


def gat_kernel(x_ref, mask_ref, params_ref, out_ref):
    x = x_ref[...]                                        # [NB, F_IN] bf16
    mask_add = mask_ref[...]                              # [NB, NB] f32 (0 / -1e30)
    w_aug = params_ref[:F_IN, :].astype(jnp.bfloat16)     # [F_IN, P_COLS]
    bias = params_ref[F_IN:F_IN + 1, :HEADS * F_OUT]      # [1, HEADS*F_OUT] f32

    # One bf16 MXU matmul gives the transformed features for both heads AND
    # the per-head attention scalars (W was augmented with W @ A on the host).
    xpa = jnp.dot(x, w_aug, preferred_element_type=jnp.float32)      # [NB, 20]
    xp = xpa[:, :HEADS * F_OUT]                                      # [NB, 16]
    a_src = xpa[:, HEADS * F_OUT:HEADS * F_OUT + HEADS]              # [NB, 2]
    a_dst = xpa[:, HEADS * F_OUT + HEADS:HEADS * F_OUT + 2 * HEADS]  # [NB, 2]

    # Single XLU transpose, reused by both heads.
    a_srcT = jnp.transpose(a_src)                                    # [2, NB]

    head_outs = []
    for h in range(HEADS):  # static, unrolled at trace time
        # e[i, j] = LeakyReLU(a_dst[i] + a_src[j])  (i = target, j = source)
        e = a_dst[:, h:h + 1] + a_srcT[h:h + 1, :]                   # [NB, NB]
        e = jnp.where(e > 0, e, NEG_SLOPE * e)
        # Additive mask (no cmp/select, no 0/1 adjacency kept live).
        e = e + mask_add
        e = e - jnp.max(e, axis=-1, keepdims=True)
        p = jnp.exp(e)                       # masked entries underflow to 0.0
        denom = jnp.sum(p, axis=-1, keepdims=True)

        # Aggregate unnormalized messages on the MXU (bf16 operands), then
        # normalize the narrow [NB, F_OUT] result (EUP reciprocal, 1 vreg mul).
        xh = xp[:, h * F_OUT:(h + 1) * F_OUT]                        # [NB, F_OUT]
        o = jnp.dot(p.astype(jnp.bfloat16), xh.astype(jnp.bfloat16),
                    preferred_element_type=jnp.float32)
        head_outs.append(o * pl.reciprocal(denom, approx=True))

    # Single bias add and a single 16-lane store for both heads.
    out_ref[...] = jnp.concatenate(head_outs, axis=-1) + bias


def gat_forward(x_all_bf16, mask_add, params):
    total_nodes = x_all_bf16.shape[0]
    num_blocks = total_nodes // NODE_BLOCK
    return pl.pallas_call(
        gat_kernel,
        out_shape=jax.ShapeDtypeStruct((total_nodes, HEADS * F_OUT), jnp.float32),
        grid_spec=pltpu.PrefetchScalarGridSpec(
            num_scalar_prefetch=0,
            grid=(num_blocks,),
            in_specs=[
                pl.BlockSpec((NODE_BLOCK, F_IN), lambda b: (b, 0)),
                pl.BlockSpec((NODE_BLOCK, NODE_BLOCK), lambda b: (0, 0)),
                pl.BlockSpec((P_ROWS, P_COLS), lambda b: (0, 0)),
            ],
            out_specs=pl.BlockSpec((NODE_BLOCK, HEADS * F_OUT), lambda b: (b, 0)),
        ),
        compiler_params=pltpu.CompilerParams(
            dimension_semantics=("parallel",)),
    )(x_all_bf16, mask_add, params)


def pack_params(w, att_src, att_dst, bias):
    """Pack W, att_src, att_dst, bias into one [F_IN+1, 20] tensor.

    W is augmented with W @ A (A block-diagonal from att_src/att_dst) so the
    kernel's single matmul also produces the per-head attention scalars.
    """
    A = jnp.zeros((HEADS * F_OUT, 2 * HEADS), dtype=jnp.float32)
    for h in range(HEADS):
        A = A.at[h * F_OUT:(h + 1) * F_OUT, h].set(att_src[h])
        A = A.at[h * F_OUT:(h + 1) * F_OUT, HEADS + h].set(att_dst[h])
    w_aug = jnp.concatenate([w, w @ A], axis=1)                        # [F_IN, 20]
    bias_row = jnp.concatenate(
        [bias, jnp.zeros((1, 2 * HEADS), dtype=jnp.float32)], axis=1)  # [1, 20]
    return jnp.concatenate([w_aug, bias_row], axis=0)                  # [17, 20]


def gat_reference(x_all, w, att_src, att_dst, mask_add, bias):
    """Pure-JAX f32 reference with identical math (exact division)."""
    outs = []
    num_blocks = x_all.shape[0] // NODE_BLOCK
    for b in range(num_blocks):
        xb = x_all[b * NODE_BLOCK:(b + 1) * NODE_BLOCK]
        xp = xb @ w
        heads = []
        for h in range(HEADS):
            xh = xp[:, h * F_OUT:(h + 1) * F_OUT]
            a_s = jnp.sum(xh * att_src[h], axis=-1, keepdims=True)
            a_d = jnp.sum(xh * att_dst[h], axis=-1, keepdims=True)
            e = a_d + a_s.T
            e = jnp.where(e > 0, e, NEG_SLOPE * e)
            e = e + mask_add
            e = e - jnp.max(e, axis=-1, keepdims=True)
            p = jnp.exp(e)
            alpha = p / jnp.sum(p, axis=-1, keepdims=True)
            heads.append(alpha @ xh)
        outs.append(jnp.concatenate(heads, axis=-1) + bias)
    return jnp.concatenate(outs, axis=0)


if __name__ == "__main__":
    key = jax.random.PRNGKey(0)
    k_x, k_w, k_as, k_ad = jax.random.split(key, 4)

    # Batched node features: 32 independent 3-node graphs, each padded to 8
    # nodes, packed 16 graphs per 128-row block.
    x_real = jax.random.normal(k_x, (NUM_GRAPHS, N, F_IN), dtype=jnp.float32)
    x_pad = jnp.zeros((NUM_GRAPHS, N_PAD, F_IN), dtype=jnp.float32)
    x_pad = x_pad.at[:, :N, :].set(x_real)
    x_all = x_pad.reshape(NUM_GRAPHS * N_PAD, F_IN)             # [256, 16]

    # Deterministic GATConv parameters (glorot-scale init), shared by all graphs.
    w = jax.random.normal(k_w, (F_IN, HEADS * F_OUT), dtype=jnp.float32) * 0.25
    att_src = jax.random.normal(k_as, (HEADS, F_OUT), dtype=jnp.float32) * 0.25
    att_dst = jax.random.normal(k_ad, (HEADS, F_OUT), dtype=jnp.float32) * 0.25
    bias = jnp.zeros((1, HEADS * F_OUT), dtype=jnp.float32)

    # edge_index = [[0, 1, 1, 2], [1, 0, 2, 1]]  (row 0 = source, row 1 = target)
    edge_index = jnp.array([[0, 1, 1, 2], [1, 0, 2, 1]], dtype=jnp.int32)

    # Per-graph 8x8 adjacency adj[dst, src] = 1, plus self-loops (padded nodes
    # only self-attend; their rows are discarded).  Block-diagonal replication
    # over the 16 graphs of a block keeps graphs independent inside the softmax.
    adj8 = jnp.zeros((N_PAD, N_PAD), dtype=jnp.float32)
    adj8 = adj8.at[edge_index[1], edge_index[0]].set(1.0)
    adj8 = adj8.at[jnp.arange(N_PAD), jnp.arange(N_PAD)].set(1.0)
    adj_block = jnp.kron(jnp.eye(GRAPHS_PER_BLOCK, dtype=jnp.float32), adj8)

    # Additive softmax mask: 0.0 on edges, -1e30 off edges.  The only
    # [128,128] operand the kernel needs.
    mask_add = jnp.where(adj_block > 0, 0.0, MASK_OFF).astype(jnp.float32)

    params = pack_params(w, att_src, att_dst, bias)             # [17, 20] f32

    # Node features shipped bf16 (half the x DMA); kernel accumulates in f32.
    x_all_bf16 = x_all.astype(jnp.bfloat16)

    out_all = gat_forward(x_all_bf16, mask_add, params)         # [256, 16]
    jax.block_until_ready(out_all)

    out = out_all.reshape(NUM_GRAPHS, N_PAD, HEADS * F_OUT)[:, :N, :]  # [32, 3, 16]

    # Reference uses the same bf16-rounded node features (the kernel's actual
    # operand values) but exact f32 math everywhere else.
    ref_all = gat_reference(x_all_bf16.astype(jnp.float32), w, att_src, att_dst,
                            mask_add, bias)
    ref = ref_all.reshape(NUM_GRAPHS, N_PAD, HEADS * F_OUT)[:, :N, :]

    assert out.shape == (NUM_GRAPHS, N, HEADS * F_OUT)
    assert bool(jnp.all(jnp.isfinite(out)))
    # Tolerance sized for bf16 MXU operands + approx reciprocal.
    assert bool(jnp.allclose(out, ref, rtol=2e-2, atol=2e-2))
    print("KERNEL_OK")
</pallas_src>

<mosaic_0001>
module attributes {stable_mosaic.version = 11 : i64} {
  func.func @gat_kernel(%arg0: i32, %arg1: memref<128x16xbf16, #tpu.memory_space<vmem>>, %arg2: memref<128x128xf32, #tpu.memory_space<vmem>>, %arg3: memref<17x20xf32, #tpu.memory_space<vmem>>, %arg4: memref<128x16xf32, #tpu.memory_space<vmem>>) attributes {dimension_semantics = [#tpu.dimension_semantics<parallel>], iteration_bounds = array<i64: 2>, scalar_prefetch = 0 : i64, scratch_operands = 0 : i64, tpu.core_type = #tpu.core_type<tc>, window_params = [{transform_indices = @transform_0, window_bounds = array<i64: 128, 16>}, {pipeline_mode = #tpu.pipeline_mode<synchronous>, transform_indices = @transform_1, window_bounds = array<i64: 128, 128>}, {pipeline_mode = #tpu.pipeline_mode<synchronous>, transform_indices = @transform_2, window_bounds = array<i64: 17, 20>}, {transform_indices = @transform_3, window_bounds = array<i64: 128, 16>}]} {
    %c0 = arith.constant 0 : index
    %c0_0 = arith.constant 0 : index
    %0 = vector.load %arg1[%c0, %c0_0] : memref<128x16xbf16, #tpu.memory_space<vmem>>, vector<128x16xbf16>
    %c0_1 = arith.constant 0 : index
    %c0_2 = arith.constant 0 : index
    %1 = vector.load %arg2[%c0_1, %c0_2] : memref<128x128xf32, #tpu.memory_space<vmem>>, vector<128x128xf32>
    %c0_3 = arith.constant 0 : index
    %c0_4 = arith.constant 0 : index
    %2 = vector.load %arg3[%c0_3, %c0_4] : memref<17x20xf32, #tpu.memory_space<vmem>>, vector<16x20xf32>
    %3 = arith.truncf %2 : vector<16x20xf32> to vector<16x20xbf16>
    %c16 = arith.constant 16 : index
    %c0_5 = arith.constant 0 : index
    %4 = vector.load %arg3[%c16, %c0_5] : memref<17x20xf32, #tpu.memory_space<vmem>>, vector<1x16xf32>
    %cst = arith.constant dense<0.000000e+00> : vector<128x20xf32>
    %5 = tpu.matmul %0, %3, %cst {dimension_numbers = #tpu.dot_dimension_numbers<[1], [0], [0], [1], [0, 0, 1, 1], [], []>} : vector<128x16xbf16>, vector<16x20xbf16>, vector<128x20xf32> -> vector<128x20xf32>
    %6 = vector.extract_strided_slice %5 {offsets = [0, 0], sizes = [128, 16], strides = [1, 1]} : vector<128x20xf32> to vector<128x16xf32>
    %7 = vector.extract_strided_slice %5 {offsets = [0, 16], sizes = [128, 2], strides = [1, 1]} : vector<128x20xf32> to vector<128x2xf32>
    %8 = vector.extract_strided_slice %5 {offsets = [0, 18], sizes = [128, 2], strides = [1, 1]} : vector<128x20xf32> to vector<128x2xf32>
    %9 = tpu.transpose %7, [1, 0] : vector<128x2xf32> -> vector<2x128xf32>
    %10 = vector.extract_strided_slice %8 {offsets = [0, 0], sizes = [128, 1], strides = [1, 1]} : vector<128x2xf32> to vector<128x1xf32>
    %11 = vector.extract_strided_slice %9 {offsets = [0, 0], sizes = [1, 128], strides = [1, 1]} : vector<2x128xf32> to vector<1x128xf32>
    %12 = vector.broadcast %10 : vector<128x1xf32> to vector<128x128xf32>
    %13 = vector.broadcast %11 : vector<1x128xf32> to vector<128x128xf32>
    %14 = arith.addf %12, %13 : vector<128x128xf32>
    %cst_6 = arith.constant 0.000000e+00 : f32
    %15 = vector.broadcast %cst_6 : f32 to vector<128x128xf32>
    %16 = arith.cmpf ogt, %14, %15 : vector<128x128xf32>
    %cst_7 = arith.constant 2.000000e-01 : f32
    %17 = vector.broadcast %cst_7 : f32 to vector<128x128xf32>
    %18 = arith.mulf %17, %14 : vector<128x128xf32>
    %19 = arith.select %16, %14, %18 : vector<128x128xi1>, vector<128x128xf32>
    %20 = arith.addf %19, %1 : vector<128x128xf32>
    %cst_8 = arith.constant dense<0xFF800000> : vector<128xf32>
    %21 = vector.multi_reduction <maximumf>, %20, %cst_8 [1] : vector<128x128xf32> to vector<128xf32>
    %22 = vector.shape_cast %21 : vector<128xf32> to vector<128x1xf32>
    %23 = vector.broadcast %22 : vector<128x1xf32> to vector<128x128xf32>
    %24 = arith.subf %20, %23 : vector<128x128xf32>
    %25 = math.exp %24 : vector<128x128xf32>
    %cst_9 = arith.constant dense<0.000000e+00> : vector<128xf32>
    %26 = vector.multi_reduction <add>, %25, %cst_9 [1] : vector<128x128xf32> to vector<128xf32>
    %27 = vector.shape_cast %26 : vector<128xf32> to vector<128x1xf32>
    %28 = vector.extract_strided_slice %6 {offsets = [0, 0], sizes = [128, 8], strides = [1, 1]} : vector<128x16xf32> to vector<128x8xf32>
    %29 = arith.truncf %25 : vector<128x128xf32> to vector<128x128xbf16>
    %30 = arith.truncf %28 : vector<128x8xf32> to vector<128x8xbf16>
    %cst_10 = arith.constant dense<0.000000e+00> : vector<128x8xf32>
    %31 = tpu.matmul %29, %30, %cst_10 {dimension_numbers = #tpu.dot_dimension_numbers<[1], [0], [0], [1], [0, 0, 1, 1], [], []>} : vector<128x128xbf16>, vector<128x8xbf16>, vector<128x8xf32> -> vector<128x8xf32>
    %32 = tpu.reciprocal %27 {approx = true} : vector<128x1xf32> -> vector<128x1xf32>
    %33 = vector.broadcast %32 : vector<128x1xf32> to vector<128x8xf32>
    %34 = arith.mulf %31, %33 : vector<128x8xf32>
    %35 = vector.extract_strided_slice %8 {offsets = [0, 1], sizes = [128, 1], strides = [1, 1]} : vector<128x2xf32> to vector<128x1xf32>
    %36 = vector.extract_strided_slice %9 {offsets = [1, 0], sizes = [1, 128], strides = [1, 1]} : vector<2x128xf32> to vector<1x128xf32>
    %37 = vector.broadcast %35 : vector<128x1xf32> to vector<128x128xf32>
    %38 = vector.broadcast %36 : vector<1x128xf32> to vector<128x128xf32>
    %39 = arith.addf %37, %38 : vector<128x128xf32>
    %cst_11 = arith.constant 0.000000e+00 : f32
    %40 = vector.broadcast %cst_11 : f32 to vector<128x128xf32>
    %41 = arith.cmpf ogt, %39, %40 : vector<128x128xf32>
    %cst_12 = arith.constant 2.000000e-01 : f32
    %42 = vector.broadcast %cst_12 : f32 to vector<128x128xf32>
    %43 = arith.mulf %42, %39 : vector<128x128xf32>
    %44 = arith.select %41, %39, %43 : vector<128x128xi1>, vector<128x128xf32>
    %45 = arith.addf %44, %1 : vector<128x128xf32>
    %cst_13 = arith.constant dense<0xFF800000> : vector<128xf32>
    %46 = vector.multi_reduction <maximumf>, %45, %cst_13 [1] : vector<128x128xf32> to vector<128xf32>
    %47 = vector.shape_cast %46 : vector<128xf32> to vector<128x1xf32>
    %48 = vector.broadcast %47 : vector<128x1xf32> to vector<128x128xf32>
    %49 = arith.subf %45, %48 : vector<128x128xf32>
    %50 = math.exp %49 : vector<128x128xf32>
    %cst_14 = arith.constant dense<0.000000e+00> : vector<128xf32>
    %51 = vector.multi_reduction <add>, %50, %cst_14 [1] : vector<128x128xf32> to vector<128xf32>
    %52 = vector.shape_cast %51 : vector<128xf32> to vector<128x1xf32>
    %53 = vector.extract_strided_slice %6 {offsets = [0, 8], sizes = [128, 8], strides = [1, 1]} : vector<128x16xf32> to vector<128x8xf32>
    %54 = arith.truncf %50 : vector<128x128xf32> to vector<128x128xbf16>
    %55 = arith.truncf %53 : vector<128x8xf32> to vector<128x8xbf16>
    %cst_15 = arith.constant dense<0.000000e+00> : vector<128x8xf32>
    %56 = tpu.matmul %54, %55, %cst_15 {dimension_numbers = #tpu.dot_dimension_numbers<[1], [0], [0], [1], [0, 0, 1, 1], [], []>} : vector<128x128xbf16>, vector<128x8xbf16>, vector<128x8xf32> -> vector<128x8xf32>
    %57 = tpu.reciprocal %52 {approx = true} : vector<128x1xf32> -> vector<128x1xf32>
    %58 = vector.broadcast %57 : vector<128x1xf32> to vector<128x8xf32>
    %59 = arith.mulf %56, %58 : vector<128x8xf32>
    %60 = tpu.concatenate %34, %59 in 1 : vector<128x8xf32>, vector<128x8xf32> -> vector<128x16xf32>
    %61 = vector.broadcast %4 : vector<1x16xf32> to vector<128x16xf32>
    %62 = arith.addf %60, %61 : vector<128x16xf32>
    %c0_16 = arith.constant 0 : index
    %c0_17 = arith.constant 0 : index
    %63 = vector.load %arg4[%c0_16, %c0_17] : memref<128x16xf32, #tpu.memory_space<vmem>>, vector<128x16xf32>
    tpu.vector_store %arg4[%c0_16, %c0_17], %62 {strides = array<i32>} : memref<128x16xf32, #tpu.memory_space<vmem>>, vector<128x16xf32>,
    return
  }
  func.func @transform_0(%arg0: i32) -> (i32, i32) {
    %c0_i32 = arith.constant 0 : i32
    %c0_i32_0 = arith.constant 0 : i32
    return %arg0, %c0_i32 : i32, i32
  }
  func.func @transform_1(%arg0: i32) -> (i32, i32) {
    %c0_i32 = arith.constant 0 : i32
    %c0_i32_0 = arith.constant 0 : i32
    %c0_i32_1 = arith.constant 0 : i32
    return %c0_i32, %c0_i32_0 : i32, i32
  }
  func.func @transform_2(%arg0: i32) -> (i32, i32) {
    %c0_i32 = arith.constant 0 : i32
    %c0_i32_0 = arith.constant 0 : i32
    %c0_i32_1 = arith.constant 0 : i32
    return %c0_i32, %c0_i32_0 : i32, i32
  }
  func.func @transform_3(%arg0: i32) -> (i32, i32) {
    %c0_i32 = arith.constant 0 : i32
    %c0_i32_0 = arith.constant 0 : i32
    return %arg0, %c0_i32 : i32, i32
  }
}

</mosaic_0001>

<llo_original>
// kernel: tpu_custom_call.1
$region0: #{tpu_custom_call.1}
  #allocation0 [shape = 'u32[]', space=smem, size = 0x4, offset = 0x4, fixed_abs, tag = 'smem constant byte address 0x4 - core index']
  #allocation1 [shape = 'u32[72,128]{1,0:T(1,128)}', space=vmem, size = 0x9000, scoped, tag = 'internal scratch']
  %s0 = inlined_call_operand.vmem [shape: bf16[256,16], index: 0, kind: input, shape index: {}]
  %s1 = inlined_call_operand.vmem [shape: f32[128,128], index: 1, kind: input, shape index: {}]
  %s2 = inlined_call_operand.hbm [shape: f32[17,20], index: 2, kind: input, shape index: {}]
  %s3 = inlined_call_operand.vmem [shape: f32[256,16], index: 3, kind: output, shape index: {}]
  %s4 = sld [smem:[#allocation0]]
  $region49: #{tpu_custom_call.1} parent=0
    _
  %s6 = ssub.s32 1, %s4
  %s7 = scalar_select 0, %s6, %s4
  $region1: #{tpu_custom_call.1} parent=0
    #allocation2 [shape = 'u8[12288]{0}', space=vmem, size = 0x3000, scoped, tag = 'input window, operand 2, single buffered']
    #allocation3 [shape = 's32[2]{0}', space=sflag, size = 0x8, scoped, tag = 'scoped memory for tpu_custom_call.1']
    %8 = vsyncpa [#allocation3], 0
    loop: start=0, step=1, limit=4
    $region2: #{tpu_custom_call.1} parent=1 // loop_pre_header
      _
    $region3: #{tpu_custom_call.1} parent=1 // loop_header
      %s10 = sphi 0, %s14
      %p11 = scmp.ge.s32.totalorder %s10, 4
      %s20 = sphi 0, %s22
      %s23 = sphi 0, %s20
      %s24 = sphi 0, %s23
      %s40 = sphi 0, %s24
      %s44 = sphi 0, %s44
      %s46 = sphi 0, %s44
      %s47 = sphi 0, %s46
      %s61 = sphi 0, %s47
      %s65 = sphi 0, %s65
      %s67 = sphi 0, %s65
      %s68 = sphi 0, %s67
      %s82 = sphi 0, %s68
      %s88 = sphi 0, %s90
      %s91 = sphi 0, %s88
      %s92 = sphi 0, %s91
      %s108 = sphi 0, %s92
    $region4: #{tpu_custom_call.1} parent=1 // loop_header_branch
      %13 = sbr.rel (%p11) target = $region8
    $region5: #{tpu_custom_call.1} parent=1 // loop_body
      %s15 = ssub.s32 %s10, 1
      %s16 = ssub.s32 %s10, 2
      %s17 = sadd.s32 %s10, 1
      %s18 = ssub.s32 %s10, %s17
      %p19 = scmp.eq.s32.totalorder %s18, 0
      %s21 = sadd.s32 %s20, 1
      %s22 = scalar_select %p19, %s20, %s21
      %p25 = pneg %p19
      %p26 = scmp.eq.s32.totalorder %s10, 1
      %p27 = por %p25, %p26
      %p28 = scmp.ne.s32.totalorder %s20, %s23
      %p29 = scmp.eq.s32.totalorder %s10, 0
      %p30 = por %p28, %p29
      %p31 = scmp.ne.s32.totalorder %s20, %s23
      %p32 = scmp.eq.s32.totalorder %s15, 1
      %p33 = por %p31, %p32
      %p34 = scmp.ne.s32.totalorder %s23, %s24
      %p35 = scmp.eq.s32.totalorder %s15, 0
      %p36 = por %p34, %p35
      %p37 = scmp.ne.s32.totalorder %s23, %s24
      %p38 = scmp.eq.s32.totalorder %s16, 1
      %p39 = por %p37, %p38
      %p41 = scmp.ne.s32.totalorder %s24, %s40
      %p42 = scmp.eq.s32.totalorder %s16, 0
      %p43 = por %p41, %p42
      %s45 = sadd.s32 %s44, 1
      %p48 = scmp.eq.s32.totalorder %s10, 1
      %p49 = scmp.ne.s32.totalorder %s44, %s46
      %p50 = scmp.eq.s32.totalorder %s10, 0
      %p51 = por %p49, %p50
      %p52 = scmp.ne.s32.totalorder %s44, %s46
      %p53 = scmp.eq.s32.totalorder %s15, 1
      %p54 = por %p52, %p53
      %p55 = scmp.ne.s32.totalorder %s46, %s47
      %p56 = scmp.eq.s32.totalorder %s15, 0
      %p57 = por %p55, %p56
      %p58 = scmp.ne.s32.totalorder %s46, %s47
      %p59 = scmp.eq.s32.totalorder %s16, 1
      %p60 = por %p58, %p59
      %p62 = scmp.ne.s32.totalorder %s47, %s61
      %p63 = scmp.eq.s32.totalorder %s16, 0
      %p64 = por %p62, %p63
      %s66 = sadd.s32 %s65, 1
      %p69 = scmp.eq.s32.totalorder %s10, 1
      %p70 = scmp.ne.s32.totalorder %s65, %s67
      %p71 = scmp.eq.s32.totalorder %s10, 0
      %p72 = por %p70, %p71
      %p73 = scmp.ne.s32.totalorder %s65, %s67
      %p74 = scmp.eq.s32.totalorder %s15, 1
      %p75 = por %p73, %p74
      %p76 = scmp.ne.s32.totalorder %s67, %s68
      %p77 = scmp.eq.s32.totalorder %s15, 0
      %p78 = por %p76, %p77
      %p79 = scmp.ne.s32.totalorder %s67, %s68
      %p80 = scmp.eq.s32.totalorder %s16, 1
      %p81 = por %p79, %p80
      %p83 = scmp.ne.s32.totalorder %s68, %s82
      %p84 = scmp.eq.s32.totalorder %s16, 0
      %p85 = por %p83, %p84
      %s86 = ssub.s32 %s10, %s17
      %p87 = scmp.eq.s32.totalorder %s86, 0
      %s89 = sadd.s32 %s88, 1
      %s90 = scalar_select %p87, %s88, %s89
      %p93 = pneg %p87
      %p94 = scmp.eq.s32.totalorder %s10, 1
      %p95 = por %p93, %p94
      %p96 = scmp.ne.s32.totalorder %s88, %s91
      %p97 = scmp.eq.s32.totalorder %s10, 0
      %p98 = por %p96, %p97
      %p99 = scmp.ne.s32.totalorder %s88, %s91
      %p100 = scmp.eq.s32.totalorder %s15, 1
      %p101 = por %p99, %p100
      %p102 = scmp.ne.s32.totalorder %s91, %s92
      %p103 = scmp.eq.s32.totalorder %s15, 0
      %p104 = por %p102, %p103
      %p105 = scmp.ne.s32.totalorder %s91, %s92
      %p106 = scmp.eq.s32.totalorder %s16, 1
      %p107 = por %p105, %p106
      %p109 = scmp.ne.s32.totalorder %s92, %s108
      %p110 = scmp.eq.s32.totalorder %s16, 0
      %p111 = por %p109, %p110
      %p112 = scmp.le.s32.totalorder 1, %s10
      %p113 = scmp.lt.s32.totalorder %s10, 3
      %p114 = pnand %p112, %p113
      %p115 = pneg %p114
      // Predicated region
      $region9: #{tpu_custom_call.1} parent=5 // pred_check
        _
      $region10: #{tpu_custom_call.1} parent=5 // pred_check_branch
        %117 = sbr.rel (%p114) target = $region12
      $region11: #{tpu_custom_call.1} parent=5 // pred_region
        %s118 = ssub.s32 %s10, 1
        // Predicated region
        $region13: #{tpu_custom_call.1} parent=11 // pred_check
          %p119 = pneg %p57
        $region14: #{tpu_custom_call.1} parent=11 // pred_check_branch
          %121 = sbr.rel (%p119) target = $region16
        $region15: #{tpu_custom_call.1} parent=11 // pred_region
          _
        $region16: #{tpu_custom_call.1} parent=11 // pred_fallthru
          _
        // Predicated region
        $region17: #{tpu_custom_call.1} parent=11 // pred_check
          %p122 = pneg %p78
        $region18: #{tpu_custom_call.1} parent=11 // pred_check_branch
          %124 = sbr.rel (%p122) target = $region20
        $region19: #{tpu_custom_call.1} parent=11 // pred_region
          %126 = vsyncadd [#allocation3], 0
          %s127 = sshll.u32 %s2, 4
          %s128 = int_to_ptr.hbm [resolvable:$true] %s127
          %s129 = sshll.u32 [#allocation2], 4
          %s130 = int_to_ptr.vmem [resolvable:$true] %s129
          %135 = dma.hbm_to_vmem [thread:$0]  %s128, 384, %s130, [#allocation3], 128, 128, 8
        $region20: #{tpu_custom_call.1} parent=11 // pred_fallthru
          _
      $region12: #{tpu_custom_call.1} parent=5 // pred_fallthru
        _
      %p136 = scmp.lt.s32.totalorder %s10, 2
      // Predicated region
      $region21: #{tpu_custom_call.1} parent=5 // pred_check
        %p137 = pneg %p136
      $region22: #{tpu_custom_call.1} parent=5 // pred_check_branch
        %139 = sbr.rel (%p137) target = $region24
      $region23: #{tpu_custom_call.1} parent=5 // pred_region
        // Predicated region
        $region25: #{tpu_custom_call.1} parent=23 // pred_check
          %p140 = pneg %p30
        $region26: #{tpu_custom_call.1} parent=23 // pred_check_branch
          %142 = sbr.rel (%p140) target = $region28
        $region27: #{tpu_custom_call.1} parent=23 // pred_region
          %s143 = smul.u32 16, %s10
          %p144 = scmp.lt.s32.totalorder %s143, 31
          %s145 = scalar_select %p144, %s143, 31
          %s146 = smul.addr %s145, 4
          %s147 = scalar_lea.vmem %s0, %s146
          %s148 = smul.u32 16, %s10
        $region28: #{tpu_custom_call.1} parent=23 // pred_fallthru
          _
      $region24: #{tpu_custom_call.1} parent=5 // pred_fallthru
        _
      %p149 = scmp.le.s32.totalorder 1, %s10
      %p150 = scmp.lt.s32.totalorder %s10, 3
      %p151 = pnand %p149, %p150
      %p152 = pneg %p151
      // Predicated region
      $region29: #{tpu_custom_call.1} parent=5 // pred_check
        _
      $region30: #{tpu_custom_call.1} parent=5 // pred_check_branch
        %154 = sbr.rel (%p151) target = $region32
      $region31: #{tpu_custom_call.1} parent=5 // pred_region
        %s155 = ssub.s32 %s10, 1
        // Predicated region
        $region33: #{tpu_custom_call.1} parent=31 // pred_check
          %p156 = pneg %p78
        $region34: #{tpu_custom_call.1} parent=31 // pred_check_branch
          %158 = sbr.rel (%p156) target = $region36
        $region35: #{tpu_custom_call.1} parent=31 // pred_region
          %160 = dma.done [#allocation3], 384
        $region36: #{tpu_custom_call.1} parent=31 // pred_fallthru
          _
        %s161 = smul.u32 16, %s15
        %p162 = scmp.lt.s32.totalorder %s161, 31
        %s163 = scalar_select %p162, %s161, 31
        %s164 = smul.addr %s163, 4
        %s165 = scalar_lea.vmem %s0, %s164
        %p166 = pneg %p36
        %p167 = pneg %p33
        %p168 = pneg %p57
        %p169 = pneg %p54
        %p170 = pneg %p78
        %p171 = pneg %p75
        %p172 = pneg %p104
        %p173 = pneg %p101
        %s174 = smul.u32 16, %s15
        %p175 = scmp.lt.s32.totalorder %s174, 31
        %s176 = scalar_select %p175, %s174, 31
        %s177 = smul.addr %s176, 8
        %s178 = scalar_lea.vmem %s3, %s177
        %s179 = smul.u32 16, %s15
        %p180 = scmp.lt.s32.totalorder %s179, 31
        %s181 = scalar_select %p180, %s179, 31
        %s182 = smul.addr %s181, 4
        %s183 = scalar_lea.vmem %s0, %s182
        %s184 = smul.u32 16, %s15
        %s185 = smul.u32 16, %s15
        %p186 = scmp.lt.s32.totalorder %s185, 31
        %s187 = scalar_select %p186, %s185, 31
        %s188 = smul.addr %s187, 8
        %s189 = scalar_lea.vmem %s3, %s188
        %s190 = smul.u32 16, %s15
        %v192 = vld [vmem:[%s183] sm:$0xf]
        %v193 = vld [vmem:[%s183 + $0x4] sm:$0xf]
        %v194 = vld [vmem:[%s183 + $0x8] sm:$0xf]
        %v195 = vld [vmem:[%s183 + $0xc] sm:$0xf]
        %v196 = vld [vmem:[%s183 + $0x10] sm:$0xf]
        %v197 = vld [vmem:[%s183 + $0x14] sm:$0xf]
        %v198 = vld [vmem:[%s183 + $0x18] sm:$0xf]
        %v199 = vld [vmem:[%s183 + $0x1c] sm:$0xf]
        %v200 = vld [vmem:[%s183 + $0x20] sm:$0xf]
        %v201 = vld [vmem:[%s183 + $0x24] sm:$0xf]
        %v202 = vld [vmem:[%s183 + $0x28] sm:$0xf]
        %v203 = vld [vmem:[%s183 + $0x2c] sm:$0xf]
        %v204 = vld [vmem:[%s183 + $0x30] sm:$0xf]
        %v205 = vld [vmem:[%s183 + $0x34] sm:$0xf]
        %v206 = vld [vmem:[%s183 + $0x38] sm:$0xf]
        %v207 = vld [vmem:[%s183 + $0x3c] sm:$0xf]
        %v208 = vld [vmem:[%s1] sm:$0xff]
        %v209 = vld [vmem:[%s1 + $0x8] sm:$0xff]
        %v210 = vld [vmem:[%s1 + $0x10] sm:$0xff]
        %v211 = vld [vmem:[%s1 + $0x18] sm:$0xff]
        %v212 = vld [vmem:[%s1 + $0x20] sm:$0xff]
        %v213 = vld [vmem:[%s1 + $0x28] sm:$0xff]
        %v214 = vld [vmem:[%s1 + $0x30] sm:$0xff]
        %v215 = vld [vmem:[%s1 + $0x38] sm:$0xff]
        %v216 = vld [vmem:[%s1 + $0x40] sm:$0xff]
        %v217 = vld [vmem:[%s1 + $0x48] sm:$0xff]
        %v218 = vld [vmem:[%s1 + $0x50] sm:$0xff]
        %v219 = vld [vmem:[%s1 + $0x58] sm:$0xff]
        %v220 = vld [vmem:[%s1 + $0x60] sm:$0xff]
        %v221 = vld [vmem:[%s1 + $0x68] sm:$0xff]
        %v222 = vld [vmem:[%s1 + $0x70] sm:$0xff]
        %v223 = vld [vmem:[%s1 + $0x78] sm:$0xff]
        %v224 = vld [vmem:[#allocation2] sm:$0xff]
        %v225 = vld [vmem:[#allocation2 + $0x8] sm:$0xff]
        %v226 = vpack.c.bf16 %v225, %v224
        %v227 = vld [vmem:[#allocation2 + $0x10] sm:$0x1]
        %v244 = vunpack.c.l.b16 %v192
        %v245 = vunpack.c.l.b16 %v193
        %v246 = vunpack.c.l.b16 %v194
        %v247 = vunpack.c.l.b16 %v195
        %v248 = vunpack.c.l.b16 %v196
        %v249 = vunpack.c.l.b16 %v197
        %v250 = vunpack.c.l.b16 %v198
        %v251 = vunpack.c.l.b16 %v199
        %v252 = vunpack.c.l.b16 %v200
        %v253 = vunpack.c.l.b16 %v201
        %v254 = vunpack.c.l.b16 %v202
        %v255 = vunpack.c.l.b16 %v203
        %v256 = vunpack.c.l.b16 %v204
        %v257 = vunpack.c.l.b16 %v205
        %v258 = vunpack.c.l.b16 %v206
        %v259 = vunpack.c.l.b16 %v207
        %v260 = vpack.c.b16 %v245, %v244
        %v261 = vpack.c.b16 %v247, %v246
        %v262 = vpack.c.b16 %v249, %v248
        %v263 = vpack.c.b16 %v251, %v250
        %v264 = vpack.c.b16 %v253, %v252
        %v265 = vpack.c.b16 %v255, %v254
        %v266 = vpack.c.b16 %v257, %v256
        %v267 = vpack.c.b16 %v259, %v258
        %vm268 = vcmask 130048
        %v270 = vsel %vm268, %v260, 0
        %v273 = vsel %vm268, %v261, 0
        %v276 = vsel %vm268, %v262, 0
        %v279 = vsel %vm268, %v263, 0
        %v282 = vsel %vm268, %v264, 0
        %v285 = vsel %vm268, %v265, 0
        %v288 = vsel %vm268, %v266, 0
        %v291 = vsel %vm268, %v267, 0
        %293 = vmatpush.bf16.msra.mxu0 0
        %294 = vmatpush.bf16.msra.mxu0 0
        %295 = vmatpush.bf16.msra.mxu0 0
        %296 = vmatpush.bf16.msra.mxu0 0
        %297 = vmatpush.bf16.msra.mxu0 0
        %298 = vmatpush.bf16.msra.mxu0 0
        %299 = vmatpush.bf16.msra.mxu0 0
        %300 = vmatpush.bf16.msra.mxu0 %v226
        %301 = vmatmul.bf16.gmra.mxu0 %v270
        %v302 = vpop.f32.mrf.mxu0
        %v303 = vadd.f32 0.0, %v302
        %v304 = vpop.f32.mrf.mxu0
        %v305 = vadd.f32 0.0, %v304
        %306 = vmatmul.bf16.gmra.mxu0 %v273
        %v307 = vpop.f32.mrf.mxu0
        %v308 = vadd.f32 0.0, %v307
        %v309 = vpop.f32.mrf.mxu0
        %v310 = vadd.f32 0.0, %v309
        %311 = vmatmul.bf16.gmra.mxu0 %v276
        %v312 = vpop.f32.mrf.mxu0
        %v313 = vadd.f32 0.0, %v312
        %v314 = vpop.f32.mrf.mxu0
        %v315 = vadd.f32 0.0, %v314
        %316 = vmatmul.bf16.gmra.mxu0 %v279
        %v317 = vpop.f32.mrf.mxu0
        %v318 = vadd.f32 0.0, %v317
        %v319 = vpop.f32.mrf.mxu0
        %v320 = vadd.f32 0.0, %v319
        %321 = vmatmul.bf16.gmra.mxu0 %v282
        %v322 = vpop.f32.mrf.mxu0
        %v323 = vadd.f32 0.0, %v322
        %v324 = vpop.f32.mrf.mxu0
        %v325 = vadd.f32 0.0, %v324
        %326 = vmatmul.bf16.gmra.mxu0 %v285
        %v327 = vpop.f32.mrf.mxu0
        %v328 = vadd.f32 0.0, %v327
        %v329 = vpop.f32.mrf.mxu0
        %v330 = vadd.f32 0.0, %v329
        %331 = vmatmul.bf16.gmra.mxu0 %v288
        %v332 = vpop.f32.mrf.mxu0
        %v333 = vadd.f32 0.0, %v332
        %v334 = vpop.f32.mrf.mxu0
        %v335 = vadd.f32 0.0, %v334
        %336 = vmatmul.bf16.gmra.mxu0 %v291
        %v337 = vpop.f32.mrf.mxu0
        %v338 = vadd.f32 0.0, %v337
        %v339 = vpop.f32.mrf.mxu0
        %v340 = vadd.f32 0.0, %v339
        %341 = vdwg.mxu0
        %358 = vrot.lane.b32.xlu0 %v303, 112
        %v359 = vpop.permute.xlu0 %358
        %360 = vrot.lane.b32.xlu0 %v305, 112
        %v361 = vpop.permute.xlu0 %360
        %362 = vrot.lane.b32.xlu0 %v308, 112
        %v363 = vpop.permute.xlu0 %362
        %364 = vrot.lane.b32.xlu0 %v310, 112
        %v365 = vpop.permute.xlu0 %364
        %366 = vrot.lane.b32.xlu0 %v313, 112
        %v367 = vpop.permute.xlu0 %366
        %368 = vrot.lane.b32.xlu0 %v315, 112
        %v369 = vpop.permute.xlu0 %368
        %370 = vrot.lane.b32.xlu0 %v318, 112
        %v371 = vpop.permute.xlu0 %370
        %372 = vrot.lane.b32.xlu0 %v320, 112
        %v373 = vpop.permute.xlu0 %372
        %374 = vrot.lane.b32.xlu0 %v323, 112
        %v375 = vpop.permute.xlu0 %374
        %376 = vrot.lane.b32.xlu0 %v325, 112
        %v377 = vpop.permute.xlu0 %376
        %378 = vrot.lane.b32.xlu0 %v328, 112
        %v379 = vpop.permute.xlu0 %378
        %380 = vrot.lane.b32.xlu0 %v330, 112
        %v381 = vpop.permute.xlu0 %380
        %382 = vrot.lane.b32.xlu0 %v333, 112
        %v383 = vpop.permute.xlu0 %382
        %384 = vrot.lane.b32.xlu0 %v335, 112
        %v385 = vpop.permute.xlu0 %384
        %386 = vrot.lane.b32.xlu0 %v338, 112
        %v387 = vpop.permute.xlu0 %386
        %388 = vrot.lane.b32.xlu0 %v340, 112
        %v389 = vpop.permute.xlu0 %388
        %406 = vxpose.xlu0.b32.start [1/16] %v359, 128
        %407 = vxpose.xlu0.b32.cont [2/16] %v361, 128
        %408 = vxpose.xlu0.b32.cont [3/16] %v363, 128
        %409 = vxpose.xlu0.b32.cont [4/16] %v365, 128
        %410 = vxpose.xlu0.b32.cont [5/16] %v367, 128
        %411 = vxpose.xlu0.b32.cont [6/16] %v369, 128
        %412 = vxpose.xlu0.b32.cont [7/16] %v371, 128
        %413 = vxpose.xlu0.b32.cont [8/16] %v373, 128
        %414 = vxpose.xlu0.b32.cont [9/16] %v375, 128
        %415 = vxpose.xlu0.b32.cont [10/16] %v377, 128
        %416 = vxpose.xlu0.b32.cont [11/16] %v379, 128
        %417 = vxpose.xlu0.b32.cont [12/16] %v381, 128
        %418 = vxpose.xlu0.b32.cont [13/16] %v383, 128
        %419 = vxpose.xlu0.b32.cont [14/16] %v385, 128
        %420 = vxpose.xlu0.b32.cont [15/16] %v387, 128
        %421 = vxpose.xlu0.b32.end [16/16] %v389, 128
        %v422 = vpop.trf.xlu0
        %v423 = vpop.trf.xlu0
        %v424 = vpop.trf.xlu0
        %v425 = vpop.trf.xlu0
        %v426 = vpop.trf.xlu0
        %v427 = vpop.trf.xlu0
        %v428 = vpop.trf.xlu0
        %v429 = vpop.trf.xlu0
        %v430 = vpop.trf.xlu0
        %v431 = vpop.trf.xlu0
        %v432 = vpop.trf.xlu0
        %v433 = vpop.trf.xlu0
        %v434 = vpop.trf.xlu0
        %v435 = vpop.trf.xlu0
        %v436 = vpop.trf.xlu0
        %v437 = vpop.trf.xlu0
        %438 = vset.pattern.permute.xlu0 18
        %439 = vperm.xlu0 %438, %v303
        %v440 = vpop.permute.xlu0 %439
        %442 = vset.pattern.permute.xlu0 18
        %443 = vperm.xlu0 %442, %v305
        %v444 = vpop.permute.xlu0 %443
        %446 = vset.pattern.permute.xlu0 18
        %447 = vperm.xlu0 %446, %v308
        %v448 = vpop.permute.xlu0 %447
        %450 = vset.pattern.permute.xlu0 18
        %451 = vperm.xlu0 %450, %v310
        %v452 = vpop.permute.xlu0 %451
        %454 = vset.pattern.permute.xlu0 18
        %455 = vperm.xlu0 %454, %v313
        %v456 = vpop.permute.xlu0 %455
        %458 = vset.pattern.permute.xlu0 18
        %459 = vperm.xlu0 %458, %v315
        %v460 = vpop.permute.xlu0 %459
        %462 = vset.pattern.permute.xlu0 18
        %463 = vperm.xlu0 %462, %v318
        %v464 = vpop.permute.xlu0 %463
        %466 = vset.pattern.permute.xlu0 18
        %467 = vperm.xlu0 %466, %v320
        %v468 = vpop.permute.xlu0 %467
        %470 = vset.pattern.permute.xlu0 18
        %471 = vperm.xlu0 %470, %v323
        %v472 = vpop.permute.xlu0 %471
        %474 = vset.pattern.permute.xlu0 18
        %475 = vperm.xlu0 %474, %v325
        %v476 = vpop.permute.xlu0 %475
        %478 = vset.pattern.permute.xlu0 18
        %479 = vperm.xlu0 %478, %v328
        %v480 = vpop.permute.xlu0 %479
        %482 = vset.pattern.permute.xlu0 18
        %483 = vperm.xlu0 %482, %v330
        %v484 = vpop.permute.xlu0 %483
        %486 = vset.pattern.permute.xlu0 18
        %487 = vperm.xlu0 %486, %v333
        %v488 = vpop.permute.xlu0 %487
        %490 = vset.pattern.permute.xlu0 18
        %491 = vperm.xlu0 %490, %v335
        %v492 = vpop.permute.xlu0 %491
        %494 = vset.pattern.permute.xlu0 18
        %495 = vperm.xlu0 %494, %v338
        %v496 = vpop.permute.xlu0 %495
        %498 = vset.pattern.permute.xlu0 18
        %499 = vperm.xlu0 %498, %v340
        %v500 = vpop.permute.xlu0 %499
        %v502 = vperm.slane %v422, 0
        %v503 = vadd.f32 %v440, %v502
        %v504 = vadd.f32 %v444, %v502
        %v505 = vadd.f32 %v448, %v502
        %v506 = vadd.f32 %v452, %v502
        %v507 = vadd.f32 %v456, %v502
        %v508 = vadd.f32 %v460, %v502
        %v509 = vadd.f32 %v464, %v502
        %v510 = vadd.f32 %v468, %v502
        %v511 = vadd.f32 %v472, %v502
        %v512 = vadd.f32 %v476, %v502
        %v513 = vadd.f32 %v480, %v502
        %v514 = vadd.f32 %v484, %v502
        %v515 = vadd.f32 %v488, %v502
        %v516 = vadd.f32 %v492, %v502
        %v517 = vadd.f32 %v496, %v502
        %v518 = vadd.f32 %v500, %v502
        %vm519 = vcmp.gt.f32.partialorder %v503, 0.0
        %vm520 = vcmp.gt.f32.partialorder %v504, 0.0
        %vm521 = vcmp.gt.f32.partialorder %v505, 0.0
        %vm522 = vcmp.gt.f32.partialorder %v506, 0.0
        %vm523 = vcmp.gt.f32.partialorder %v507, 0.0
        %vm524 = vcmp.gt.f32.partialorder %v508, 0.0
        %vm525 = vcmp.gt.f32.partialorder %v509, 0.0
        %vm526 = vcmp.gt.f32.partialorder %v510, 0.0
        %vm527 = vcmp.gt.f32.partialorder %v511, 0.0
        %vm528 = vcmp.gt.f32.partialorder %v512, 0.0
        %vm529 = vcmp.gt.f32.partialorder %v513, 0.0
        %vm530 = vcmp.gt.f32.partialorder %v514, 0.0
        %vm531 = vcmp.gt.f32.partialorder %v515, 0.0
        %vm532 = vcmp.gt.f32.partialorder %v516, 0.0
        %vm533 = vcmp.gt.f32.partialorder %v517, 0.0
        %vm534 = vcmp.gt.f32.partialorder %v518, 0.0
        %v535 = vmul.f32 %v503, 0.2
        %v536 = vmul.f32 %v504, 0.2
        %v537 = vmul.f32 %v505, 0.2
        %v538 = vmul.f32 %v506, 0.2
        %v539 = vmul.f32 %v507, 0.2
        %v540 = vmul.f32 %v508, 0.2
        %v541 = vmul.f32 %v509, 0.2
        %v542 = vmul.f32 %v510, 0.2
        %v543 = vmul.f32 %v511, 0.2
        %v544 = vmul.f32 %v512, 0.2
        %v545 = vmul.f32 %v513, 0.2
        %v546 = vmul.f32 %v514, 0.2
        %v547 = vmul.f32 %v515, 0.2
        %v548 = vmul.f32 %v516, 0.2
        %v549 = vmul.f32 %v517, 0.2
        %v550 = vmul.f32 %v518, 0.2
        %v551 = vsel %vm519, %v503, %v535
        %v552 = vsel %vm520, %v504, %v536
        %v553 = vsel %vm521, %v505, %v537
        %v554 = vsel %vm522, %v506, %v538
        %v555 = vsel %vm523, %v507, %v539
        %v556 = vsel %vm524, %v508, %v540
        %v557 = vsel %vm525, %v509, %v541
        %v558 = vsel %vm526, %v510, %v542
        %v559 = vsel %vm527, %v511, %v543
        %v560 = vsel %vm528, %v512, %v544
        %v561 = vsel %vm529, %v513, %v545
        %v562 = vsel %vm530, %v514, %v546
        %v563 = vsel %vm531, %v515, %v547
        %v564 = vsel %vm532, %v516, %v548
        %v565 = vsel %vm533, %v517, %v549
        %v566 = vsel %vm534, %v518, %v550
        %v567 = vadd.f32 %v551, %v208
        %v568 = vadd.f32 %v552, %v209
        %v569 = vadd.f32 %v553, %v210
        %v570 = vadd.f32 %v554, %v211
        %v571 = vadd.f32 %v555, %v212
        %v572 = vadd.f32 %v556, %v213
        %v573 = vadd.f32 %v557, %v214
        %v574 = vadd.f32 %v558, %v215
        %v575 = vadd.f32 %v559, %v216
        %v576 = vadd.f32 %v560, %v217
        %v577 = vadd.f32 %v561, %v218
        %v578 = vadd.f32 %v562, %v219
        %v579 = vadd.f32 %v563, %v220
        %v580 = vadd.f32 %v564, %v221
        %v581 = vadd.f32 %v565, %v222
        %v582 = vadd.f32 %v566, %v223
        %583 = vmax.xlane.f32.xlu0 %v567
        %v584 = vpop.xlane.xlu0 %583
        %585 = vmax.xlane.f32.xlu0 %v568
        %v586 = vpop.xlane.xlu0 %585
        %587 = vmax.xlane.f32.xlu0 %v569
        %v588 = vpop.xlane.xlu0 %587
        %589 = vmax.xlane.f32.xlu0 %v570
        %v590 = vpop.xlane.xlu0 %589
        %591 = vmax.xlane.f32.xlu0 %v571
        %v592 = vpop.xlane.xlu0 %591
        %593 = vmax.xlane.f32.xlu0 %v572
        %v594 = vpop.xlane.xlu0 %593
        %595 = vmax.xlane.f32.xlu0 %v573
        %v596 = vpop.xlane.xlu0 %595
        %597 = vmax.xlane.f32.xlu0 %v574
        %v598 = vpop.xlane.xlu0 %597
        %599 = vmax.xlane.f32.xlu0 %v575
        %v600 = vpop.xlane.xlu0 %599
        %601 = vmax.xlane.f32.xlu0 %v576
        %v602 = vpop.xlane.xlu0 %601
        %603 = vmax.xlane.f32.xlu0 %v577
        %v604 = vpop.xlane.xlu0 %603
        %605 = vmax.xlane.f32.xlu0 %v578
        %v606 = vpop.xlane.xlu0 %605
        %607 = vmax.xlane.f32.xlu0 %v579
        %v608 = vpop.xlane.xlu0 %607
        %609 = vmax.xlane.f32.xlu0 %v580
        %v610 = vpop.xlane.xlu0 %609
        %611 = vmax.xlane.f32.xlu0 %v581
        %v612 = vpop.xlane.xlu0 %611
        %613 = vmax.xlane.f32.xlu0 %v582
        %v614 = vpop.xlane.xlu0 %613
        %v615 = vsub.f32 %v567, %v584
        %v616 = vsub.f32 %v568, %v586
        %v617 = vsub.f32 %v569, %v588
        %v618 = vsub.f32 %v570, %v590
        %v619 = vsub.f32 %v571, %v592
        %v620 = vsub.f32 %v572, %v594
        %v621 = vsub.f32 %v573, %v596
        %v622 = vsub.f32 %v574, %v598
        %v623 = vsub.f32 %v575, %v600
        %v624 = vsub.f32 %v576, %v602
        %v625 = vsub.f32 %v577, %v604
        %v626 = vsub.f32 %v578, %v606
        %v627 = vsub.f32 %v579, %v608
        %v628 = vsub.f32 %v580, %v610
        %v629 = vsub.f32 %v581, %v612
        %v630 = vsub.f32 %v582, %v614
        %v631 = vmul.f32 %v615, 1.442695
        %v632 = vpow.pop %v631
        %v633 = vmul.f32 %v616, 1.442695
        %v634 = vpow.pop %v633
        %v635 = vmul.f32 %v617, 1.442695
        %v636 = vpow.pop %v635
        %v637 = vmul.f32 %v618, 1.442695
        %v638 = vpow.pop %v637
        %v639 = vmul.f32 %v619, 1.442695
        %v640 = vpow.pop %v639
        %v641 = vmul.f32 %v620, 1.442695
        %v642 = vpow.pop %v641
        %v643 = vmul.f32 %v621, 1.442695
        %v644 = vpow.pop %v643
        %v645 = vmul.f32 %v622, 1.442695
        %v646 = vpow.pop %v645
        %v647 = vmul.f32 %v623, 1.442695
        %v648 = vpow.pop %v647
        %v649 = vmul.f32 %v624, 1.442695
        %v650 = vpow.pop %v649
        %v651 = vmul.f32 %v625, 1.442695
        %v652 = vpow.pop %v651
        %v653 = vmul.f32 %v626, 1.442695
        %v654 = vpow.pop %v653
        %v655 = vmul.f32 %v627, 1.442695
        %v656 = vpow.pop %v655
        %v657 = vmul.f32 %v628, 1.442695
        %v658 = vpow.pop %v657
        %v659 = vmul.f32 %v629, 1.442695
        %v660 = vpow.pop %v659
        %v661 = vmul.f32 %v630, 1.442695
        %v662 = vpow.pop %v661
        %663 = vadd.xlane.f32.xlu0 %v632
        %v664 = vpop.xlane.xlu0 %663
        %665 = vadd.xlane.f32.xlu0 %v634
        %v666 = vpop.xlane.xlu0 %665
        %667 = vadd.xlane.f32.xlu0 %v636
        %v668 = vpop.xlane.xlu0 %667
        %669 = vadd.xlane.f32.xlu0 %v638
        %v670 = vpop.xlane.xlu0 %669
        %671 = vadd.xlane.f32.xlu0 %v640
        %v672 = vpop.xlane.xlu0 %671
        %673 = vadd.xlane.f32.xlu0 %v642
        %v674 = vpop.xlane.xlu0 %673
        %675 = vadd.xlane.f32.xlu0 %v644
        %v676 = vpop.xlane.xlu0 %675
        %677 = vadd.xlane.f32.xlu0 %v646
        %v678 = vpop.xlane.xlu0 %677
        %679 = vadd.xlane.f32.xlu0 %v648
        %v680 = vpop.xlane.xlu0 %679
        %681 = vadd.xlane.f32.xlu0 %v650
        %v682 = vpop.xlane.xlu0 %681
        %683 = vadd.xlane.f32.xlu0 %v652
        %v684 = vpop.xlane.xlu0 %683
        %685 = vadd.xlane.f32.xlu0 %v654
        %v686 = vpop.xlane.xlu0 %685
        %687 = vadd.xlane.f32.xlu0 %v656
        %v688 = vpop.xlane.xlu0 %687
        %689 = vadd.xlane.f32.xlu0 %v658
        %v690 = vpop.xlane.xlu0 %689
        %691 = vadd.xlane.f32.xlu0 %v660
        %v692 = vpop.xlane.xlu0 %691
        %693 = vadd.xlane.f32.xlu0 %v662
        %v694 = vpop.xlane.xlu0 %693
        %v695 = vpack.c.bf16 %v634, %v632
        %v696 = vpack.c.bf16 %v638, %v636
        %v697 = vpack.c.bf16 %v642, %v640
        %v698 = vpack.c.bf16 %v646, %v644
        %v699 = vpack.c.bf16 %v650, %v648
        %v700 = vpack.c.bf16 %v654, %v652
        %v701 = vpack.c.bf16 %v658, %v656
        %v702 = vpack.c.bf16 %v662, %v660
        %v703 = vpack.c.bf16 %v305, %v303
        %v704 = vpack.c.bf16 %v310, %v308
        %v705 = vpack.c.bf16 %v315, %v313
        %v706 = vpack.c.bf16 %v320, %v318
        %v707 = vpack.c.bf16 %v325, %v323
        %v708 = vpack.c.bf16 %v330, %v328
        %v709 = vpack.c.bf16 %v335, %v333
        %v710 = vpack.c.bf16 %v340, %v338
        %711 = vmatpush.bf16.msra.mxu0 %v710
        %712 = vmatpush.bf16.msra.mxu0 %v709
        %713 = vmatpush.bf16.msra.mxu0 %v708
        %714 = vmatpush.bf16.msra.mxu0 %v707
        %715 = vmatpush.bf16.msra.mxu0 %v706
        %716 = vmatpush.bf16.msra.mxu0 %v705
        %717 = vmatpush.bf16.msra.mxu0 %v704
        %718 = vmatpush.bf16.msra.mxu0 %v703
        %719 = vmatmul.bf16.gmra.mxu0 %v695
        %v720 = vpop.f32.mrf.mxu0
        %v721 = vadd.f32 0.0, %v720
        %v722 = vpop.f32.mrf.mxu0
        %v723 = vadd.f32 0.0, %v722
        %724 = vmatmul.bf16.gmra.mxu0 %v696
        %v725 = vpop.f32.mrf.mxu0
        %v726 = vadd.f32 0.0, %v725
        %v727 = vpop.f32.mrf.mxu0
        %v728 = vadd.f32 0.0, %v727
        %729 = vmatmul.bf16.gmra.mxu0 %v697
        %v730 = vpop.f32.mrf.mxu0
        %v731 = vadd.f32 0.0, %v730
        %v732 = vpop.f32.mrf.mxu0
        %v733 = vadd.f32 0.0, %v732
        %734 = vmatmul.bf16.gmra.mxu0 %v698
        %v735 = vpop.f32.mrf.mxu0
        %v736 = vadd.f32 0.0, %v735
        %v737 = vpop.f32.mrf.mxu0
        %v738 = vadd.f32 0.0, %v737
        %739 = vmatmul.bf16.gmra.mxu0 %v699
        %v740 = vpop.f32.mrf.mxu0
        %v741 = vadd.f32 0.0, %v740
        %v742 = vpop.f32.mrf.mxu0
        %v743 = vadd.f32 0.0, %v742
        %744 = vmatmul.bf16.gmra.mxu0 %v700
        %v745 = vpop.f32.mrf.mxu0
        %v746 = vadd.f32 0.0, %v745
        %v747 = vpop.f32.mrf.mxu0
        %v748 = vadd.f32 0.0, %v747
        %749 = vmatmul.bf16.gmra.mxu0 %v701
        %v750 = vpop.f32.mrf.mxu0
        %v751 = vadd.f32 0.0, %v750
        %v752 = vpop.f32.mrf.mxu0
        %v753 = vadd.f32 0.0, %v752
        %754 = vmatmul.bf16.gmra.mxu0 %v702
        %v755 = vpop.f32.mrf.mxu0
        %v756 = vadd.f32 0.0, %v755
        %v757 = vpop.f32.mrf.mxu0
        %v758 = vadd.f32 0.0, %v757
        %759 = vdwg.mxu0
        %v760 = vrcp.pop %v664
        %v761 = vrcp.pop %v666
        %v762 = vrcp.pop %v668
        %v763 = vrcp.pop %v670
        %v764 = vrcp.pop %v672
        %v765 = vrcp.pop %v674
        %v766 = vrcp.pop %v676
        %v767 = vrcp.pop %v678
        %v768 = vrcp.pop %v680
        %v769 = vrcp.pop %v682
        %v770 = vrcp.pop %v684
        %v771 = vrcp.pop %v686
        %v772 = vrcp.pop %v688
        %v773 = vrcp.pop %v690
        %v774 = vrcp.pop %v692
        %v775 = vrcp.pop %v694
        %v776 = vmul.f32 %v721, %v760
        %v777 = vmul.f32 %v723, %v761
        %v778 = vmul.f32 %v726, %v762
        %v779 = vmul.f32 %v728, %v763
        %v780 = vmul.f32 %v731, %v764
        %v781 = vmul.f32 %v733, %v765
        %v782 = vmul.f32 %v736, %v766
        %v783 = vmul.f32 %v738, %v767
        %v784 = vmul.f32 %v741, %v768
        %v785 = vmul.f32 %v743, %v769
        %v786 = vmul.f32 %v746, %v770
        %v787 = vmul.f32 %v748, %v771
        %v788 = vmul.f32 %v751, %v772
        %v789 = vmul.f32 %v753, %v773
        %v790 = vmul.f32 %v756, %v774
        %v791 = vmul.f32 %v758, %v775
        %792 = vset.pattern.permute.xlu0 19
        %793 = vperm.xlu0 %792, %v303
        %v794 = vpop.permute.xlu0 %793
        %796 = vset.pattern.permute.xlu0 19
        %797 = vperm.xlu0 %796, %v305
        %v798 = vpop.permute.xlu0 %797
        %800 = vset.pattern.permute.xlu0 19
        %801 = vperm.xlu0 %800, %v308
        %v802 = vpop.permute.xlu0 %801
        %804 = vset.pattern.permute.xlu0 19
        %805 = vperm.xlu0 %804, %v310
        %v806 = vpop.permute.xlu0 %805
        %808 = vset.pattern.permute.xlu0 19
        %809 = vperm.xlu0 %808, %v313
        %v810 = vpop.permute.xlu0 %809
        %812 = vset.pattern.permute.xlu0 19
        %813 = vperm.xlu0 %812, %v315
        %v814 = vpop.permute.xlu0 %813
        %816 = vset.pattern.permute.xlu0 19
        %817 = vperm.xlu0 %816, %v318
        %v818 = vpop.permute.xlu0 %817
        %820 = vset.pattern.permute.xlu0 19
        %821 = vperm.xlu0 %820, %v320
        %v822 = vpop.permute.xlu0 %821
        %824 = vset.pattern.permute.xlu0 19
        %825 = vperm.xlu0 %824, %v323
        %v826 = vpop.permute.xlu0 %825
        %828 = vset.pattern.permute.xlu0 19
        %829 = vperm.xlu0 %828, %v325
        %v830 = vpop.permute.xlu0 %829
        %832 = vset.pattern.permute.xlu0 19
        %833 = vperm.xlu0 %832, %v328
        %v834 = vpop.permute.xlu0 %833
        %836 = vset.pattern.permute.xlu0 19
        %837 = vperm.xlu0 %836, %v330
        %v838 = vpop.permute.xlu0 %837
        %840 = vset.pattern.permute.xlu0 19
        %841 = vperm.xlu0 %840, %v333
        %v842 = vpop.permute.xlu0 %841
        %844 = vset.pattern.permute.xlu0 19
        %845 = vperm.xlu0 %844, %v335
        %v846 = vpop.permute.xlu0 %845
        %848 = vset.pattern.permute.xlu0 19
        %849 = vperm.xlu0 %848, %v338
        %v850 = vpop.permute.xlu0 %849
        %852 = vset.pattern.permute.xlu0 19
        %853 = vperm.xlu0 %852, %v340
        %v854 = vpop.permute.xlu0 %853
        %v856 = vperm.slane %v422, 1
        %v857 = vadd.f32 %v794, %v856
        %v858 = vadd.f32 %v798, %v856
        %v859 = vadd.f32 %v802, %v856
        %v860 = vadd.f32 %v806, %v856
        %v861 = vadd.f32 %v810, %v856
        %v862 = vadd.f32 %v814, %v856
        %v863 = vadd.f32 %v818, %v856
        %v864 = vadd.f32 %v822, %v856
        %v865 = vadd.f32 %v826, %v856
        %v866 = vadd.f32 %v830, %v856
        %v867 = vadd.f32 %v834, %v856
        %v868 = vadd.f32 %v838, %v856
        %v869 = vadd.f32 %v842, %v856
        %v870 = vadd.f32 %v846, %v856
        %v871 = vadd.f32 %v850, %v856
        %v872 = vadd.f32 %v854, %v856
        %vm873 = vcmp.gt.f32.partialorder %v857, 0.0
        %vm874 = vcmp.gt.f32.partialorder %v858, 0.0
        %vm875 = vcmp.gt.f32.partialorder %v859, 0.0
        %vm876 = vcmp.gt.f32.partialorder %v860, 0.0
        %vm877 = vcmp.gt.f32.partialorder %v861, 0.0
        %vm878 = vcmp.gt.f32.partialorder %v862, 0.0
        %vm879 = vcmp.gt.f32.partialorder %v863, 0.0
        %vm880 = vcmp.gt.f32.partialorder %v864, 0.0
        %vm881 = vcmp.gt.f32.partialorder %v865, 0.0
        %vm882 = vcmp.gt.f32.partialorder %v866, 0.0
        %vm883 = vcmp.gt.f32.partialorder %v867, 0.0
        %vm884 = vcmp.gt.f32.partialorder %v868, 0.0
        %vm885 = vcmp.gt.f32.partialorder %v869, 0.0
        %vm886 = vcmp.gt.f32.partialorder %v870, 0.0
        %vm887 = vcmp.gt.f32.partialorder %v871, 0.0
        %vm888 = vcmp.gt.f32.partialorder %v872, 0.0
        %v889 = vmul.f32 %v857, 0.2
        %v890 = vmul.f32 %v858, 0.2
        %v891 = vmul.f32 %v859, 0.2
        %v892 = vmul.f32 %v860, 0.2
        %v893 = vmul.f32 %v861, 0.2
        %v894 = vmul.f32 %v862, 0.2
        %v895 = vmul.f32 %v863, 0.2
        %v896 = vmul.f32 %v864, 0.2
        %v897 = vmul.f32 %v865, 0.2
        %v898 = vmul.f32 %v866, 0.2
        %v899 = vmul.f32 %v867, 0.2
        %v900 = vmul.f32 %v868, 0.2
        %v901 = vmul.f32 %v869, 0.2
        %v902 = vmul.f32 %v870, 0.2
        %v903 = vmul.f32 %v871, 0.2
        %v904 = vmul.f32 %v872, 0.2
        %v905 = vsel %vm873, %v857, %v889
        %v906 = vsel %vm874, %v858, %v890
        %v907 = vsel %vm875, %v859, %v891
        %v908 = vsel %vm876, %v860, %v892
        %v909 = vsel %vm877, %v861, %v893
        %v910 = vsel %vm878, %v862, %v894
        %v911 = vsel %vm879, %v863, %v895
        %v912 = vsel %vm880, %v864, %v896
        %v913 = vsel %vm881, %v865, %v897
        %v914 = vsel %vm882, %v866, %v898
        %v915 = vsel %vm883, %v867, %v899
        %v916 = vsel %vm884, %v868, %v900
        %v917 = vsel %vm885, %v869, %v901
        %v918 = vsel %vm886, %v870, %v902
        %v919 = vsel %vm887, %v871, %v903
        %v920 = vsel %vm888, %v872, %v904
        %v921 = vadd.f32 %v905, %v208
        %v922 = vadd.f32 %v906, %v209
        %v923 = vadd.f32 %v907, %v210
        %v924 = vadd.f32 %v908, %v211
        %v925 = vadd.f32 %v909, %v212
        %v926 = vadd.f32 %v910, %v213
        %v927 = vadd.f32 %v911, %v214
        %v928 = vadd.f32 %v912, %v215
        %v929 = vadd.f32 %v913, %v216
        %v930 = vadd.f32 %v914, %v217
        %v931 = vadd.f32 %v915, %v218
        %v932 = vadd.f32 %v916, %v219
        %v933 = vadd.f32 %v917, %v220
        %v934 = vadd.f32 %v918, %v221
        %v935 = vadd.f32 %v919, %v222
        %v936 = vadd.f32 %v920, %v223
        %937 = vmax.xlane.f32.xlu0 %v921
        %v938 = vpop.xlane.xlu0 %937
        %939 = vmax.xlane.f32.xlu0 %v922
        %v940 = vpop.xlane.xlu0 %939
        %941 = vmax.xlane.f32.xlu0 %v923
        %v942 = vpop.xlane.xlu0 %941
        %943 = vmax.xlane.f32.xlu0 %v924
        %v944 = vpop.xlane.xlu0 %943
        %945 = vmax.xlane.f32.xlu0 %v925
        %v946 = vpop.xlane.xlu0 %945
        %947 = vmax.xlane.f32.xlu0 %v926
        %v948 = vpop.xlane.xlu0 %947
        %949 = vmax.xlane.f32.xlu0 %v927
        %v950 = vpop.xlane.xlu0 %949
        %951 = vmax.xlane.f32.xlu0 %v928
        %v952 = vpop.xlane.xlu0 %951
        %953 = vmax.xlane.f32.xlu0 %v929
        %v954 = vpop.xlane.xlu0 %953
        %955 = vmax.xlane.f32.xlu0 %v930
        %v956 = vpop.xlane.xlu0 %955
        %957 = vmax.xlane.f32.xlu0 %v931
        %v958 = vpop.xlane.xlu0 %957
        %959 = vmax.xlane.f32.xlu0 %v932
        %v960 = vpop.xlane.xlu0 %959
        %961 = vmax.xlane.f32.xlu0 %v933
        %v962 = vpop.xlane.xlu0 %961
        %963 = vmax.xlane.f32.xlu0 %v934
        %v964 = vpop.xlane.xlu0 %963
        %965 = vmax.xlane.f32.xlu0 %v935
        %v966 = vpop.xlane.xlu0 %965
        %967 = vmax.xlane.f32.xlu0 %v936
        %v968 = vpop.xlane.xlu0 %967
        %v969 = vsub.f32 %v921, %v938
        %v970 = vsub.f32 %v922, %v940
        %v971 = vsub.f32 %v923, %v942
        %v972 = vsub.f32 %v924, %v944
        %v973 = vsub.f32 %v925, %v946
        %v974 = vsub.f32 %v926, %v948
        %v975 = vsub.f32 %v927, %v950
        %v976 = vsub.f32 %v928, %v952
        %v977 = vsub.f32 %v929, %v954
        %v978 = vsub.f32 %v930, %v956
        %v979 = vsub.f32 %v931, %v958
        %v980 = vsub.f32 %v932, %v960
        %v981 = vsub.f32 %v933, %v962
        %v982 = vsub.f32 %v934, %v964
        %v983 = vsub.f32 %v935, %v966
        %v984 = vsub.f32 %v936, %v968
        %v985 = vmul.f32 %v969, 1.442695
        %v986 = vpow.pop %v985
        %v987 = vmul.f32 %v970, 1.442695
        %v988 = vpow.pop %v987
        %v989 = vmul.f32 %v971, 1.442695
        %v990 = vpow.pop %v989
        %v991 = vmul.f32 %v972, 1.442695
        %v992 = vpow.pop %v991
        %v993 = vmul.f32 %v973, 1.442695
        %v994 = vpow.pop %v993
        %v995 = vmul.f32 %v974, 1.442695
        %v996 = vpow.pop %v995
        %v997 = vmul.f32 %v975, 1.442695
        %v998 = vpow.pop %v997
        %v999 = vmul.f32 %v976, 1.442695
        %v1000 = vpow.pop %v999
        %v1001 = vmul.f32 %v977, 1.442695
        %v1002 = vpow.pop %v1001
        %v1003 = vmul.f32 %v978, 1.442695
        %v1004 = vpow.pop %v1003
        %v1005 = vmul.f32 %v979, 1.442695
        %v1006 = vpow.pop %v1005
        %v1007 = vmul.f32 %v980, 1.442695
        %v1008 = vpow.pop %v1007
        %v1009 = vmul.f32 %v981, 1.442695
        %v1010 = vpow.pop %v1009
        %v1011 = vmul.f32 %v982, 1.442695
        %v1012 = vpow.pop %v1011
        %v1013 = vmul.f32 %v983, 1.442695
        %v1014 = vpow.pop %v1013
        %v1015 = vmul.f32 %v984, 1.442695
        %v1016 = vpow.pop %v1015
        %1017 = vadd.xlane.f32.xlu0 %v986
        %v1018 = vpop.xlane.xlu0 %1017
        %1019 = vadd.xlane.f32.xlu0 %v988
        %v1020 = vpop.xlane.xlu0 %1019
        %1021 = vadd.xlane.f32.xlu0 %v990
        %v1022 = vpop.xlane.xlu0 %1021
        %1023 = vadd.xlane.f32.xlu0 %v992
        %v1024 = vpop.xlane.xlu0 %1023
        %1025 = vadd.xlane.f32.xlu0 %v994
        %v1026 = vpop.xlane.xlu0 %1025
        %1027 = vadd.xlane.f32.xlu0 %v996
        %v1028 = vpop.xlane.xlu0 %1027
        %1029 = vadd.xlane.f32.xlu0 %v998
        %v1030 = vpop.xlane.xlu0 %1029
        %1031 = vadd.xlane.f32.xlu0 %v1000
        %v1032 = vpop.xlane.xlu0 %1031
        %1033 = vadd.xlane.f32.xlu0 %v1002
        %v1034 = vpop.xlane.xlu0 %1033
        %1035 = vadd.xlane.f32.xlu0 %v1004
        %v1036 = vpop.xlane.xlu0 %1035
        %1037 = vadd.xlane.f32.xlu0 %v1006
        %v1038 = vpop.xlane.xlu0 %1037
        %1039 = vadd.xlane.f32.xlu0 %v1008
        %v1040 = vpop.xlane.xlu0 %1039
        %1041 = vadd.xlane.f32.xlu0 %v1010
        %v1042 = vpop.xlane.xlu0 %1041
        %1043 = vadd.xlane.f32.xlu0 %v1012
        %v1044 = vpop.xlane.xlu0 %1043
        %1045 = vadd.xlane.f32.xlu0 %v1014
        %v1046 = vpop.xlane.xlu0 %1045
        %1047 = vadd.xlane.f32.xlu0 %v1016
        %v1048 = vpop.xlane.xlu0 %1047
        %v1049 = vpack.c.bf16 %v988, %v986
        %v1050 = vpack.c.bf16 %v992, %v990
        %v1051 = vpack.c.bf16 %v996, %v994
        %v1052 = vpack.c.bf16 %v1000, %v998
        %v1053 = vpack.c.bf16 %v1004, %v1002
        %v1054 = vpack.c.bf16 %v1008, %v1006
        %v1055 = vpack.c.bf16 %v1012, %v1010
        %v1056 = vpack.c.bf16 %v1016, %v1014
        %1065 = vrot.lane.b32.xlu0 %v703, 120
        %v1066 = vpop.permute.xlu0 %1065
        %1067 = vrot.lane.b32.xlu0 %v704, 120
        %v1068 = vpop.permute.xlu0 %1067
        %1069 = vrot.lane.b32.xlu0 %v705, 120
        %v1070 = vpop.permute.xlu0 %1069
        %1071 = vrot.lane.b32.xlu0 %v706, 120
        %v1072 = vpop.permute.xlu0 %1071
        %1073 = vrot.lane.b32.xlu0 %v707, 120
        %v1074 = vpop.permute.xlu0 %1073
        %1075 = vrot.lane.b32.xlu0 %v708, 120
        %v1076 = vpop.permute.xlu0 %1075
        %1077 = vrot.lane.b32.xlu0 %v709, 120
        %v1078 = vpop.permute.xlu0 %1077
        %1079 = vrot.lane.b32.xlu0 %v710, 120
        %v1080 = vpop.permute.xlu0 %1079
        %1089 = vmatpush.bf16.msra.mxu0 %v1080
        %1090 = vmatpush.bf16.msra.mxu0 %v1078
        %1091 = vmatpush.bf16.msra.mxu0 %v1076
        %1092 = vmatpush.bf16.msra.mxu0 %v1074
        %1093 = vmatpush.bf16.msra.mxu0 %v1072
        %1094 = vmatpush.bf16.msra.mxu0 %v1070
        %1095 = vmatpush.bf16.msra.mxu0 %v1068
        %1096 = vmatpush.bf16.msra.mxu0 %v1066
        %1097 = vmatmul.bf16.gmra.mxu0 %v1049
        %v1098 = vpop.f32.mrf.mxu0
        %v1099 = vadd.f32 0.0, %v1098
        %v1100 = vpop.f32.mrf.mxu0
        %v1101 = vadd.f32 0.0, %v1100
        %1102 = vmatmul.bf16.gmra.mxu0 %v1050
        %v1103 = vpop.f32.mrf.mxu0
        %v1104 = vadd.f32 0.0, %v1103
        %v1105 = vpop.f32.mrf.mxu0
        %v1106 = vadd.f32 0.0, %v1105
        %1107 = vmatmul.bf16.gmra.mxu0 %v1051
        %v1108 = vpop.f32.mrf.mxu0
        %v1109 = vadd.f32 0.0, %v1108
        %v1110 = vpop.f32.mrf.mxu0
        %v1111 = vadd.f32 0.0, %v1110
        %1112 = vmatmul.bf16.gmra.mxu0 %v1052
        %v1113 = vpop.f32.mrf.mxu0
        %v1114 = vadd.f32 0.0, %v1113
        %v1115 = vpop.f32.mrf.mxu0
        %v1116 = vadd.f32 0.0, %v1115
        %1117 = vmatmul.bf16.gmra.mxu0 %v1053
        %v1118 = vpop.f32.mrf.mxu0
        %v1119 = vadd.f32 0.0, %v1118
        %v1120 = vpop.f32.mrf.mxu0
        %v1121 = vadd.f32 0.0, %v1120
        %1122 = vmatmul.bf16.gmra.mxu0 %v1054
        %v1123 = vpop.f32.mrf.mxu0
        %v1124 = vadd.f32 0.0, %v1123
        %v1125 = vpop.f32.mrf.mxu0
        %v1126 = vadd.f32 0.0, %v1125
        %1127 = vmatmul.bf16.gmra.mxu0 %v1055
        %v1128 = vpop.f32.mrf.mxu0
        %v1129 = vadd.f32 0.0, %v1128
        %v1130 = vpop.f32.mrf.mxu0
        %v1131 = vadd.f32 0.0, %v1130
        %1132 = vmatmul.bf16.gmra.mxu0 %v1056
        %v1133 = vpop.f32.mrf.mxu0
        %v1134 = vadd.f32 0.0, %v1133
        %v1135 = vpop.f32.mrf.mxu0
        %v1136 = vadd.f32 0.0, %v1135
        %1137 = vdwg.mxu0
        %v1138 = vrcp.pop %v1018
        %v1139 = vrcp.pop %v1020
        %v1140 = vrcp.pop %v1022
        %v1141 = vrcp.pop %v1024
        %v1142 = vrcp.pop %v1026
        %v1143 = vrcp.pop %v1028
        %v1144 = vrcp.pop %v1030
        %v1145 = vrcp.pop %v1032
        %v1146 = vrcp.pop %v1034
        %v1147 = vrcp.pop %v1036
        %v1148 = vrcp.pop %v1038
        %v1149 = vrcp.pop %v1040
        %v1150 = vrcp.pop %v1042
        %v1151 = vrcp.pop %v1044
        %v1152 = vrcp.pop %v1046
        %v1153 = vrcp.pop %v1048
        %v1154 = vmul.f32 %v1099, %v1138
        %v1155 = vmul.f32 %v1101, %v1139
        %v1156 = vmul.f32 %v1104, %v1140
        %v1157 = vmul.f32 %v1106, %v1141
        %v1158 = vmul.f32 %v1109, %v1142
        %v1159 = vmul.f32 %v1111, %v1143
        %v1160 = vmul.f32 %v1114, %v1144
        %v1161 = vmul.f32 %v1116, %v1145
        %v1162 = vmul.f32 %v1119, %v1146
        %v1163 = vmul.f32 %v1121, %v1147
        %v1164 = vmul.f32 %v1124, %v1148
        %v1165 = vmul.f32 %v1126, %v1149
        %v1166 = vmul.f32 %v1129, %v1150
        %v1167 = vmul.f32 %v1131, %v1151
        %v1168 = vmul.f32 %v1134, %v1152
        %v1169 = vmul.f32 %v1136, %v1153
        %1186 = vrot.lane.b32.xlu0 %v1154, 8
        %v1187 = vpop.permute.xlu0 %1186
        %1188 = vrot.lane.b32.xlu0 %v1155, 8
        %v1189 = vpop.permute.xlu0 %1188
        %1190 = vrot.lane.b32.xlu0 %v1156, 8
        %v1191 = vpop.permute.xlu0 %1190
        %1192 = vrot.lane.b32.xlu0 %v1157, 8
        %v1193 = vpop.permute.xlu0 %1192
        %1194 = vrot.lane.b32.xlu0 %v1158, 8
        %v1195 = vpop.permute.xlu0 %1194
        %1196 = vrot.lane.b32.xlu0 %v1159, 8
        %v1197 = vpop.permute.xlu0 %1196
        %1198 = vrot.lane.b32.xlu0 %v1160, 8
        %v1199 = vpop.permute.xlu0 %1198
        %1200 = vrot.lane.b32.xlu0 %v1161, 8
        %v1201 = vpop.permute.xlu0 %1200
        %1202 = vrot.lane.b32.xlu0 %v1162, 8
        %v1203 = vpop.permute.xlu0 %1202
        %1204 = vrot.lane.b32.xlu0 %v1163, 8
        %v1205 = vpop.permute.xlu0 %1204
        %1206 = vrot.lane.b32.xlu0 %v1164, 8
        %v1207 = vpop.permute.xlu0 %1206
        %1208 = vrot.lane.b32.xlu0 %v1165, 8
        %v1209 = vpop.permute.xlu0 %1208
        %1210 = vrot.lane.b32.xlu0 %v1166, 8
        %v1211 = vpop.permute.xlu0 %1210
        %1212 = vrot.lane.b32.xlu0 %v1167, 8
        %v1213 = vpop.permute.xlu0 %1212
        %1214 = vrot.lane.b32.xlu0 %v1168, 8
        %v1215 = vpop.permute.xlu0 %1214
        %1216 = vrot.lane.b32.xlu0 %v1169, 8
        %v1217 = vpop.permute.xlu0 %1216
        %vm1234 = vcmask 64512
        %v1235 = vsel %vm1234, %v776, %v1187
        %v1236 = vsel %vm1234, %v777, %v1189
        %v1237 = vsel %vm1234, %v778, %v1191
        %v1238 = vsel %vm1234, %v779, %v1193
        %v1239 = vsel %vm1234, %v780, %v1195
        %v1240 = vsel %vm1234, %v781, %v1197
        %v1241 = vsel %vm1234, %v782, %v1199
        %v1242 = vsel %vm1234, %v783, %v1201
        %v1243 = vsel %vm1234, %v784, %v1203
        %v1244 = vsel %vm1234, %v785, %v1205
        %v1245 = vsel %vm1234, %v786, %v1207
        %v1246 = vsel %vm1234, %v787, %v1209
        %v1247 = vsel %vm1234, %v788, %v1211
        %v1248 = vsel %vm1234, %v789, %v1213
        %v1249 = vsel %vm1234, %v790, %v1215
        %v1250 = vsel %vm1234, %v791, %v1217
        %v1251 = vperm.slane %v227, 0
        %v1252 = vadd.f32 %v1235, %v1251
        %v1253 = vadd.f32 %v1236, %v1251
        %v1254 = vadd.f32 %v1237, %v1251
        %v1255 = vadd.f32 %v1238, %v1251
        %v1256 = vadd.f32 %v1239, %v1251
        %v1257 = vadd.f32 %v1240, %v1251
        %v1258 = vadd.f32 %v1241, %v1251
        %v1259 = vadd.f32 %v1242, %v1251
        %v1260 = vadd.f32 %v1243, %v1251
        %v1261 = vadd.f32 %v1244, %v1251
        %v1262 = vadd.f32 %v1245, %v1251
        %v1263 = vadd.f32 %v1246, %v1251
        %v1264 = vadd.f32 %v1247, %v1251
        %v1265 = vadd.f32 %v1248, %v1251
        %v1266 = vadd.f32 %v1249, %v1251
        %v1267 = vadd.f32 %v1250, %v1251
        %1268 = vst.msk [vmem:[%s189] sm:$0xff] %vm268, %v1252
        %1269 = vst.msk [vmem:[%s189 + $0x8] sm:$0xff] %vm268, %v1253
        %1270 = vst.msk [vmem:[%s189 + $0x10] sm:$0xff] %vm268, %v1254
        %1271 = vst.msk [vmem:[%s189 + $0x18] sm:$0xff] %vm268, %v1255
        %1272 = vst.msk [vmem:[%s189 + $0x20] sm:$0xff] %vm268, %v1256
        %1273 = vst.msk [vmem:[%s189 + $0x28] sm:$0xff] %vm268, %v1257
        %1274 = vst.msk [vmem:[%s189 + $0x30] sm:$0xff] %vm268, %v1258
        %1275 = vst.msk [vmem:[%s189 + $0x38] sm:$0xff] %vm268, %v1259
        %1276 = vst.msk [vmem:[%s189 + $0x40] sm:$0xff] %vm268, %v1260
        %1277 = vst.msk [vmem:[%s189 + $0x48] sm:$0xff] %vm268, %v1261
        %1278 = vst.msk [vmem:[%s189 + $0x50] sm:$0xff] %vm268, %v1262
        %1279 = vst.msk [vmem:[%s189 + $0x58] sm:$0xff] %vm268, %v1263
        %1280 = vst.msk [vmem:[%s189 + $0x60] sm:$0xff] %vm268, %v1264
        %1281 = vst.msk [vmem:[%s189 + $0x68] sm:$0xff] %vm268, %v1265
        %1282 = vst.msk [vmem:[%s189 + $0x70] sm:$0xff] %vm268, %v1266
        %1283 = vst.msk [vmem:[%s189 + $0x78] sm:$0xff] %vm268, %v1267
        %s1284 = smul.u32 16, %s15
        %p1285 = scmp.lt.s32.totalorder %s1284, 31
        %s1286 = scalar_select %p1285, %s1284, 31
        %s1287 = smul.addr %s1286, 8
        %s1288 = scalar_lea.vmem %s3, %s1287
        // Predicated region
        $region37: #{tpu_custom_call.1} parent=31 // pred_check
          %p1289 = pneg %p101
        $region38: #{tpu_custom_call.1} parent=31 // pred_check_branch
          %1291 = sbr.rel (%p1289) target = $region40
        $region39: #{tpu_custom_call.1} parent=31 // pred_region
          %s1292 = smul.u32 16, %s15
        $region40: #{tpu_custom_call.1} parent=31 // pred_fallthru
          _
      $region32: #{tpu_custom_call.1} parent=5 // pred_fallthru
        _
      %p1293 = scmp.le.s32.totalorder 2, %s10
      // Predicated region
      $region41: #{tpu_custom_call.1} parent=5 // pred_check
        %p1294 = pneg %p1293
      $region42: #{tpu_custom_call.1} parent=5 // pred_check_branch
        %1296 = sbr.rel (%p1294) target = $region44
      $region43: #{tpu_custom_call.1} parent=5 // pred_region
        %s1297 = ssub.s32 %s10, 2
        // Predicated region
        $region45: #{tpu_custom_call.1} parent=43 // pred_check
          %p1298 = pneg %p107
        $region46: #{tpu_custom_call.1} parent=43 // pred_check_branch
          %1300 = sbr.rel (%p1298) target = $region48
        $region47: #{tpu_custom_call.1} parent=43 // pred_region
          %s1301 = smul.u32 16, %s16
          %p1302 = scmp.lt.s32.totalorder %s1301, 31
          %s1303 = scalar_select %p1302, %s1301, 31
          %s1304 = smul.addr %s1303, 8
          %s1305 = scalar_lea.vmem %s3, %s1304
        $region48: #{tpu_custom_call.1} parent=43 // pred_fallthru
          _
      $region44: #{tpu_custom_call.1} parent=5 // pred_fallthru
        _
    $region6: #{tpu_custom_call.1} parent=1 // loop_footer
      %s14 = sadd.s32 1, %s10
    $region7: #{tpu_custom_call.1} parent=1 // loop_footer_branch
      %9 = sbr.rel target = $region3
    $region8: #{tpu_custom_call.1} parent=1 // loop_exit
      _
    %1306 = vsyncpa [#allocation3], 1
    %s1307 = scalar_lea.sflag [#allocation3], 1
    %1308 = vsyncpa %s1307, 1

</llo_original>
